<compile_context>
chip_gen: v7x
topology: tpu7x:2x2x1
jax: 0.10.0
libtpu: 0.0.40
codegen_flags: <defaults>
</compile_context>

<pallas_src>
import jax
import jax.numpy as jnp
from jax.experimental import pallas as pl
from jax.experimental.pallas import tpu as pltpu


def _round_up(n, m):
    return ((n + m - 1) // m) * m


def mlp_kernel(x_ref, w1_ref, b1_ref, w2_ref, b2_ref, o_ref):
    # hidden_layer: x @ W1 + b1   (W1 already stored (in, hidden) -> no .T)
    h = jnp.dot(x_ref[...], w1_ref[...], preferred_element_type=jnp.float32)
    h = h + b1_ref[...]                      # (1, hidden_p) broadcasts over batch
    # output_layer: h @ W2 + b2   (W2 already stored (hidden, out) -> no .T)
    o = jnp.dot(h, w2_ref[...], preferred_element_type=jnp.float32)
    o = o + b2_ref[...]
    o_ref[...] = o.astype(o_ref.dtype)


def mlp_forward(x, w1, b1, w2, b2, *, tile_b=256):
    """Fused MLP forward.  x: (B, in); w1/w2 in PyTorch (out, in) layout."""
    batch, in_dim = x.shape
    hid_dim = w1.shape[0]
    out_dim = w2.shape[0]

    # Lane-dense padding of the feature dims (128-lane vregs).  Zero-padding
    # is exact: padded hidden units contribute 0 to the second matmul, padded
    # output lanes are sliced away below.
    hid_p = _round_up(hid_dim, 128)
    out_p = _round_up(out_dim, 128)

    dt = x.dtype
    w1t = jnp.zeros((in_dim, hid_p), dt).at[:, :hid_dim].set(w1.T)
    b1p = jnp.zeros((1, hid_p), dt).at[:, :hid_dim].set(b1.reshape(1, -1))
    w2t = jnp.zeros((hid_p, out_p), dt).at[:hid_dim, :out_dim].set(w2.T)
    b2p = jnp.zeros((1, out_p), dt).at[:, :out_dim].set(b2.reshape(1, -1))

    # Batch tiling: one tile at toy sizes; scales to a parallel grid (v7x can
    # spread tiles across its 2 TensorCores) when the batch grows.
    tile_b = min(tile_b, _round_up(batch, 8))
    b_pad = _round_up(batch, tile_b)
    if b_pad != batch:
        x = jnp.zeros((b_pad, in_dim), dt).at[:batch].set(x)
    grid = (b_pad // tile_b,)

    out_padded = pl.pallas_call(
        mlp_kernel,
        out_shape=jax.ShapeDtypeStruct((b_pad, out_p), dt),
        grid_spec=pltpu.PrefetchScalarGridSpec(
            num_scalar_prefetch=0,
            grid=grid,
            in_specs=[
                pl.BlockSpec((tile_b, in_dim), lambda i: (i, 0)),   # x streamed
                pl.BlockSpec((in_dim, hid_p), lambda i: (0, 0)),    # W1 resident
                pl.BlockSpec((1, hid_p), lambda i: (0, 0)),         # b1 resident
                pl.BlockSpec((hid_p, out_p), lambda i: (0, 0)),     # W2 resident
                pl.BlockSpec((1, out_p), lambda i: (0, 0)),         # b2 resident
            ],
            out_specs=pl.BlockSpec((tile_b, out_p), lambda i: (i, 0)),
        ),
        compiler_params=pltpu.CompilerParams(
            dimension_semantics=("parallel",)),
    )(x, w1t, b1p, w2t, b2p)

    # Slice away batch and lane padding.
    return out_padded[:batch, :out_dim]


def init_linear(key, in_features, out_features, dtype=jnp.float32):
    # Mimic PyTorch nn.Linear default init: U(-1/sqrt(fan_in), 1/sqrt(fan_in))
    kw, kb = jax.random.split(key)
    bound = 1.0 / jnp.sqrt(jnp.asarray(in_features, dtype))
    w = jax.random.uniform(kw, (out_features, in_features), dtype, -bound, bound)
    b = jax.random.uniform(kb, (out_features,), dtype, -bound, bound)
    return w, b


if __name__ == "__main__":
    input_dim, hidden_dim, output_dim = 32, 10, 4
    batch = 8

    key = jax.random.PRNGKey(0)
    kx, k1, k2 = jax.random.split(key, 3)

    x = jax.random.normal(kx, (batch, input_dim), jnp.float32)
    w1, b1 = init_linear(k1, input_dim, hidden_dim)
    w2, b2 = init_linear(k2, hidden_dim, output_dim)

    out = mlp_forward(x, w1, b1, w2, b2)
    jax.block_until_ready(out)

    # Pure-JAX reference check (original PyTorch layout math).
    ref = (x @ w1.T + b1) @ w2.T + b2
    assert out.shape == (batch, output_dim)
    assert jnp.allclose(out, ref, atol=1e-5, rtol=1e-5)

    print("KERNEL_OK")
</pallas_src>

<mosaic_0001>
module attributes {stable_mosaic.version = 11 : i64} {
  func.func @mlp_kernel(%arg0: i32, %arg1: memref<8x32xf32, #tpu.memory_space<vmem>>, %arg2: memref<32x128xf32, #tpu.memory_space<vmem>>, %arg3: memref<1x128xf32, #tpu.memory_space<vmem>>, %arg4: memref<128x128xf32, #tpu.memory_space<vmem>>, %arg5: memref<1x128xf32, #tpu.memory_space<vmem>>, %arg6: memref<8x128xf32, #tpu.memory_space<vmem>>) attributes {dimension_semantics = [#tpu.dimension_semantics<parallel>], iteration_bounds = array<i64: 1>, scalar_prefetch = 0 : i64, scratch_operands = 0 : i64, tpu.core_type = #tpu.core_type<tc>, window_params = [{transform_indices = @transform_0, window_bounds = array<i64: 8, 32>}, {pipeline_mode = #tpu.pipeline_mode<synchronous>, transform_indices = @transform_1, window_bounds = array<i64: 32, 128>}, {pipeline_mode = #tpu.pipeline_mode<synchronous>, transform_indices = @transform_2, window_bounds = array<i64: 1, 128>}, {pipeline_mode = #tpu.pipeline_mode<synchronous>, transform_indices = @transform_3, window_bounds = array<i64: 128, 128>}, {pipeline_mode = #tpu.pipeline_mode<synchronous>, transform_indices = @transform_4, window_bounds = array<i64: 1, 128>}, {transform_indices = @transform_5, window_bounds = array<i64: 8, 128>}]} {
    %c0 = arith.constant 0 : index
    %c0_0 = arith.constant 0 : index
    %0 = vector.load %arg1[%c0, %c0_0] : memref<8x32xf32, #tpu.memory_space<vmem>>, vector<8x32xf32>
    %c0_1 = arith.constant 0 : index
    %c0_2 = arith.constant 0 : index
    %1 = vector.load %arg2[%c0_1, %c0_2] : memref<32x128xf32, #tpu.memory_space<vmem>>, vector<32x128xf32>
    %cst = arith.constant dense<0.000000e+00> : vector<8x128xf32>
    %2 = tpu.matmul %0, %1, %cst {dimension_numbers = #tpu.dot_dimension_numbers<[1], [0], [0], [1], [0, 0, 1, 1], [], []>} : vector<8x32xf32>, vector<32x128xf32>, vector<8x128xf32> -> vector<8x128xf32>
    %c0_3 = arith.constant 0 : index
    %c0_4 = arith.constant 0 : index
    %3 = vector.load %arg3[%c0_3, %c0_4] : memref<1x128xf32, #tpu.memory_space<vmem>>, vector<1x128xf32>
    %4 = vector.broadcast %3 : vector<1x128xf32> to vector<8x128xf32>
    %5 = arith.addf %2, %4 : vector<8x128xf32>
    %c0_5 = arith.constant 0 : index
    %c0_6 = arith.constant 0 : index
    %6 = vector.load %arg4[%c0_5, %c0_6] : memref<128x128xf32, #tpu.memory_space<vmem>>, vector<128x128xf32>
    %cst_7 = arith.constant dense<0.000000e+00> : vector<8x128xf32>
    %7 = tpu.matmul %5, %6, %cst_7 {dimension_numbers = #tpu.dot_dimension_numbers<[1], [0], [0], [1], [0, 0, 1, 1], [], []>} : vector<8x128xf32>, vector<128x128xf32>, vector<8x128xf32> -> vector<8x128xf32>
    %c0_8 = arith.constant 0 : index
    %c0_9 = arith.constant 0 : index
    %8 = vector.load %arg5[%c0_8, %c0_9] : memref<1x128xf32, #tpu.memory_space<vmem>>, vector<1x128xf32>
    %9 = vector.broadcast %8 : vector<1x128xf32> to vector<8x128xf32>
    %10 = arith.addf %7, %9 : vector<8x128xf32>
    %c0_10 = arith.constant 0 : index
    %c0_11 = arith.constant 0 : index
    %11 = vector.load %arg6[%c0_10, %c0_11] : memref<8x128xf32, #tpu.memory_space<vmem>>, vector<8x128xf32>
    tpu.vector_store %arg6[%c0_10, %c0_11], %10 {strides = array<i32>} : memref<8x128xf32, #tpu.memory_space<vmem>>, vector<8x128xf32>,
    return
  }
  func.func @transform_0(%arg0: i32) -> (i32, i32) {
    %c0_i32 = arith.constant 0 : i32
    %c0_i32_0 = arith.constant 0 : i32
    return %arg0, %c0_i32 : i32, i32
  }
  func.func @transform_1(%arg0: i32) -> (i32, i32) {
    %c0_i32 = arith.constant 0 : i32
    %c0_i32_0 = arith.constant 0 : i32
    %c0_i32_1 = arith.constant 0 : i32
    return %c0_i32, %c0_i32_0 : i32, i32
  }
  func.func @transform_2(%arg0: i32) -> (i32, i32) {
    %c0_i32 = arith.constant 0 : i32
    %c0_i32_0 = arith.constant 0 : i32
    %c0_i32_1 = arith.constant 0 : i32
    return %c0_i32, %c0_i32_0 : i32, i32
  }
  func.func @transform_3(%arg0: i32) -> (i32, i32) {
    %c0_i32 = arith.constant 0 : i32
    %c0_i32_0 = arith.constant 0 : i32
    %c0_i32_1 = arith.constant 0 : i32
    return %c0_i32, %c0_i32_0 : i32, i32
  }
  func.func @transform_4(%arg0: i32) -> (i32, i32) {
    %c0_i32 = arith.constant 0 : i32
    %c0_i32_0 = arith.constant 0 : i32
    %c0_i32_1 = arith.constant 0 : i32
    return %c0_i32, %c0_i32_0 : i32, i32
  }
  func.func @transform_5(%arg0: i32) -> (i32, i32) {
    %c0_i32 = arith.constant 0 : i32
    %c0_i32_0 = arith.constant 0 : i32
    return %arg0, %c0_i32 : i32, i32
  }
}

</mosaic_0001>

<llo_original>
// kernel: tpu_custom_call.1
$region0: #{tpu_custom_call.1}
  #allocation0 [shape = 'u32[]', space=smem, size = 0x4, offset = 0x4, fixed_abs, tag = 'smem constant byte address 0x4 - core index']
  #allocation1 [shape = 'u32[144,128]{1,0:T(1,128)}', space=vmem, size = 0x12000, scoped, tag = 'internal scratch']
  %s0 = inlined_call_operand.hbm [shape: f32[8,32], index: 0, kind: input, shape index: {}]
  %s1 = inlined_call_operand.hbm [shape: f32[32,128], index: 1, kind: input, shape index: {}]
  %s2 = inlined_call_operand.vmem [shape: f32[1,128], index: 2, kind: input, shape index: {}]
  %s3 = inlined_call_operand.hbm [shape: f32[128,128], index: 3, kind: input, shape index: {}]
  %s4 = inlined_call_operand.vmem [shape: f32[1,128], index: 4, kind: input, shape index: {}]
  %s5 = inlined_call_operand.hbm [shape: f32[8,128], index: 5, kind: output, shape index: {}]
  %s6 = sld [smem:[#allocation0]]
  $region42: #{tpu_custom_call.1} parent=0
    _
  %s8 = ssub.s32 1, %s6
  %s9 = scalar_select 0, %s8, %s6
  $region1: #{tpu_custom_call.1} parent=0
    #allocation2 [shape = 'u8[4096]{0}', space=vmem, size = 0x1000, scoped, tag = 'input window, operand 0, single buffered']
    #allocation3 [shape = 's32[1]{0}', space=sflag, size = 0x4, scoped, tag = 'scoped memory for tpu_custom_call.1']
    #allocation4 [shape = 's32[1]{0}', space=sflag, size = 0x4, scoped, tag = 'scoped memory for tpu_custom_call.1']
    #allocation5 [shape = 'u8[16384]{0}', space=vmem, size = 0x4000, scoped, tag = 'input window, operand 1, single buffered']
    #allocation6 [shape = 's32[1]{0}', space=sflag, size = 0x4, scoped, tag = 'scoped memory for tpu_custom_call.1']
    #allocation7 [shape = 'u8[65536]{0}', space=vmem, size = 0x10000, scoped, tag = 'input window, operand 3, single buffered']
    #allocation8 [shape = 'u8[4096]{0}', space=vmem, size = 0x1000, scoped, tag = 'output window, operand 0, single buffered']
    %10 = vsyncpa [#allocation3], 0
    %11 = vsyncpa [#allocation6], 0
    %12 = vsyncpa [#allocation4], 0
    // Predicated region
    $region2: #{tpu_custom_call.1} parent=1 // pred_check
      _
    $region3: #{tpu_custom_call.1} parent=1 // pred_check_branch
      %14 = sbr.rel (0) target = $region5
    $region4: #{tpu_custom_call.1} parent=1 // pred_region
      %s16 = ssub.s32 128, 128
      %17 = vsyncadd [#allocation3], %s16
      %s19 = sshll.u32 [#allocation2], 4
      %s20 = int_to_ptr.vmem [resolvable:$true] %s19
      %22 = dma.hbm_to_vmem [thread:$0]  %s0, 128, %s20, [#allocation3]
    $region5: #{tpu_custom_call.1} parent=1 // pred_fallthru
      _
    // Predicated region
    $region6: #{tpu_custom_call.1} parent=1 // pred_check
      _
    $region7: #{tpu_custom_call.1} parent=1 // pred_check_branch
      %24 = sbr.rel (0) target = $region9
    $region8: #{tpu_custom_call.1} parent=1 // pred_region
      %s26 = ssub.s32 512, 512
      %27 = vsyncadd [#allocation6], %s26
      %s28 = sshll.u32 [#allocation5], 4
      %s29 = int_to_ptr.vmem [resolvable:$true] %s28
      %34 = dma.hbm_to_vmem [thread:$0]  %s1, 512, %s29, [#allocation6], 128, 128, 8
    $region9: #{tpu_custom_call.1} parent=1 // pred_fallthru
      _
    // Predicated region
    $region10: #{tpu_custom_call.1} parent=1 // pred_check
      _
    $region11: #{tpu_custom_call.1} parent=1 // pred_check_branch
      %36 = sbr.rel (0) target = $region13
    $region12: #{tpu_custom_call.1} parent=1 // pred_region
      _
    $region13: #{tpu_custom_call.1} parent=1 // pred_fallthru
      _
    // Predicated region
    $region14: #{tpu_custom_call.1} parent=1 // pred_check
      _
    $region15: #{tpu_custom_call.1} parent=1 // pred_check_branch
      %38 = sbr.rel (0) target = $region17
    $region16: #{tpu_custom_call.1} parent=1 // pred_region
      %s40 = ssub.s32 2048, 2048
      %41 = vsyncadd [#allocation6], %s40
      %s42 = sshll.u32 [#allocation7], 4
      %s43 = int_to_ptr.vmem [resolvable:$true] %s42
      %48 = dma.hbm_to_vmem [thread:$0]  %s3, 2048, %s43, [#allocation6], 128, 128, 8
    $region17: #{tpu_custom_call.1} parent=1 // pred_fallthru
      _
    // Predicated region
    $region18: #{tpu_custom_call.1} parent=1 // pred_check
      _
    $region19: #{tpu_custom_call.1} parent=1 // pred_check_branch
      %50 = sbr.rel (0) target = $region21
    $region20: #{tpu_custom_call.1} parent=1 // pred_region
      _
    $region21: #{tpu_custom_call.1} parent=1 // pred_fallthru
      _
    // Predicated region
    $region22: #{tpu_custom_call.1} parent=1 // pred_check
      _
    $region23: #{tpu_custom_call.1} parent=1 // pred_check_branch
      %52 = sbr.rel (0) target = $region25
    $region24: #{tpu_custom_call.1} parent=1 // pred_region
      %53 = dma.done [#allocation3], 128
    $region25: #{tpu_custom_call.1} parent=1 // pred_fallthru
      _
    // Predicated region
    $region26: #{tpu_custom_call.1} parent=1 // pred_check
      _
    $region27: #{tpu_custom_call.1} parent=1 // pred_check_branch
      %55 = sbr.rel (0) target = $region29
    $region28: #{tpu_custom_call.1} parent=1 // pred_region
      %56 = dma.done [#allocation6], 512
    $region29: #{tpu_custom_call.1} parent=1 // pred_fallthru
      _
    // Predicated region
    $region30: #{tpu_custom_call.1} parent=1 // pred_check
      _
    $region31: #{tpu_custom_call.1} parent=1 // pred_check_branch
      %58 = sbr.rel (0) target = $region33
    $region32: #{tpu_custom_call.1} parent=1 // pred_region
      %59 = dma.done [#allocation6], 2048
    $region33: #{tpu_custom_call.1} parent=1 // pred_fallthru
      _
    %v60 = vld [vmem:[#allocation2] sm:$0xff]
    %v61 = vld [vmem:[#allocation5] sm:$0xff]
    %v62 = vld [vmem:[#allocation5 + $0x8] sm:$0xff]
    %v63 = vld [vmem:[#allocation5 + $0x10] sm:$0xff]
    %v64 = vld [vmem:[#allocation5 + $0x18] sm:$0xff]
    %v65 = vld [vmem:[%s2] sm:$0x1]
    %v67 = vlaneseq
    %v68 = vshrl.u32 %v67, 7
    %v69 = vsub.s32 0, %v68
    %v70 = vrot.slane %v65, %v69
    %vm72 = vcmask 261120
    %v74 = vsel %vm72, %v60, 0
    %76 = vmatprep.subr.mxu0 0.0
    %77 = vmatpush1.msra.mxu0 %v61
    %78 = vmatprep.subr.mxu0 0.0
    %79 = vmatpush1.msra.mxu0 %v62
    %80 = vmatprep.subr.mxu0 0.0
    %81 = vmatpush1.msra.mxu0 %v63
    %82 = vmatprep.subr.mxu0 0.0
    %83 = vmatpush1.msra.mxu0 %v64
    %84 = vmatprep.subr.mxu0 0.0
    %85 = vmatpush1.msra.mxu0 0.0
    %86 = vmatprep.subr.mxu0 0.0
    %87 = vmatpush1.msra.mxu0 0.0
    %88 = vmatprep.subr.mxu0 0.0
    %89 = vmatpush1.msra.mxu0 0.0
    %90 = vmatprep.subr.mxu0 0.0
    %91 = vmatpush1.msra.mxu0 0.0
    %92 = vmatprep.subr.mxu0 0.0
    %93 = vmatpush1.msra.mxu0 0.0
    %94 = vmatprep.subr.mxu0 0.0
    %95 = vmatpush1.msra.mxu0 0.0
    %96 = vmatprep.subr.mxu0 0.0
    %97 = vmatpush1.msra.mxu0 0.0
    %98 = vmatprep.subr.mxu0 0.0
    %99 = vmatpush1.msra.mxu0 0.0
    %100 = vmatprep.subr.mxu0 0.0
    %101 = vmatpush1.msra.mxu0 0.0
    %102 = vmatprep.subr.mxu0 0.0
    %103 = vmatpush1.msra.mxu0 0.0
    %104 = vmatprep.subr.mxu0 0.0
    %105 = vmatpush1.msra.mxu0 0.0
    %106 = vmatprep.subr.mxu0 0.0
    %107 = vmatpush1.msra.mxu0 0.0
    %108 = vmatprep.subr.mxu0 0.0
    %109 = vmatpush1.msra.mxu0 0.0
    %110 = vmatprep.subr.mxu0 0.0
    %111 = vmatpush1.msra.mxu0 0.0
    %112 = vmatprep.subr.mxu0 0.0
    %113 = vmatpush1.msra.mxu0 0.0
    %114 = vmatprep.subr.mxu0 0.0
    %115 = vmatpush1.msra.mxu0 0.0
    %116 = vmatprep.subr.mxu0 0.0
    %117 = vmatpush1.msra.mxu0 0.0
    %118 = vmatprep.subr.mxu0 0.0
    %119 = vmatpush1.msra.mxu0 0.0
    %120 = vmatprep.subr.mxu0 0.0
    %121 = vmatpush1.msra.mxu0 0.0
    %122 = vmatprep.subr.mxu0 0.0
    %123 = vmatpush1.msra.mxu0 0.0
    %124 = vmatprep.subr.mxu0 0.0
    %125 = vmatpush1.msra.mxu0 0.0
    %126 = vmatprep.subr.mxu0 0.0
    %127 = vmatpush1.msra.mxu0 0.0
    %128 = vmatprep.subr.mxu0 0.0
    %129 = vmatpush1.msra.mxu0 0.0
    %130 = vmatprep.subr.mxu0 0.0
    %131 = vmatpush1.msra.mxu0 0.0
    %132 = vmatprep.subr.mxu0 0.0
    %133 = vmatpush1.msra.mxu0 0.0
    %134 = vmatprep.subr.mxu0 0.0
    %135 = vmatpush1.msra.mxu0 0.0
    %136 = vmatprep.subr.mxu0 0.0
    %137 = vmatpush1.msra.mxu0 0.0
    %138 = vmatprep.subr.mxu0 0.0
    %139 = vmatpush1.msra.mxu0 0.0
    %140 = vmatprep.mubr.f32.mxu0 0.0
    %141 = vmatmul.mubr.f32.gmra.mrb[0].mxu0 %v74
    %v142 = vpop.f32.mrb[0].mxu0
    %v143 = vadd.f32 %v70, %v142
    %v144 = vpop.f32.mrb[0].mxu0
    %145 = vdwg.mxu0
    %v146 = vld [vmem:[#allocation7] sm:$0xff]
    %v147 = vld [vmem:[#allocation7 + $0x8] sm:$0xff]
    %v148 = vld [vmem:[#allocation7 + $0x10] sm:$0xff]
    %v149 = vld [vmem:[#allocation7 + $0x18] sm:$0xff]
    %v150 = vld [vmem:[#allocation7 + $0x20] sm:$0xff]
    %v151 = vld [vmem:[#allocation7 + $0x28] sm:$0xff]
    %v152 = vld [vmem:[#allocation7 + $0x30] sm:$0xff]
    %v153 = vld [vmem:[#allocation7 + $0x38] sm:$0xff]
    %v154 = vld [vmem:[#allocation7 + $0x40] sm:$0xff]
    %v155 = vld [vmem:[#allocation7 + $0x48] sm:$0xff]
    %v156 = vld [vmem:[#allocation7 + $0x50] sm:$0xff]
    %v157 = vld [vmem:[#allocation7 + $0x58] sm:$0xff]
    %v158 = vld [vmem:[#allocation7 + $0x60] sm:$0xff]
    %v159 = vld [vmem:[#allocation7 + $0x68] sm:$0xff]
    %v160 = vld [vmem:[#allocation7 + $0x70] sm:$0xff]
    %v161 = vld [vmem:[#allocation7 + $0x78] sm:$0xff]
    %v162 = vld [vmem:[%s4] sm:$0x1]
    %v164 = vlaneseq
    %v165 = vshrl.u32 %v164, 7
    %v166 = vsub.s32 0, %v165
    %v167 = vrot.slane %v162, %v166
    %169 = vmatprep.subr.mxu0 0.0
    %170 = vmatpush1.msra.mxu0 %v146
    %171 = vmatprep.subr.mxu0 0.0
    %172 = vmatpush1.msra.mxu0 %v147
    %173 = vmatprep.subr.mxu0 0.0
    %174 = vmatpush1.msra.mxu0 %v148
    %175 = vmatprep.subr.mxu0 0.0
    %176 = vmatpush1.msra.mxu0 %v149
    %177 = vmatprep.subr.mxu0 0.0
    %178 = vmatpush1.msra.mxu0 %v150
    %179 = vmatprep.subr.mxu0 0.0
    %180 = vmatpush1.msra.mxu0 %v151
    %181 = vmatprep.subr.mxu0 0.0
    %182 = vmatpush1.msra.mxu0 %v152
    %183 = vmatprep.subr.mxu0 0.0
    %184 = vmatpush1.msra.mxu0 %v153
    %185 = vmatprep.subr.mxu0 0.0
    %186 = vmatpush1.msra.mxu0 %v154
    %187 = vmatprep.subr.mxu0 0.0
    %188 = vmatpush1.msra.mxu0 %v155
    %189 = vmatprep.subr.mxu0 0.0
    %190 = vmatpush1.msra.mxu0 %v156
    %191 = vmatprep.subr.mxu0 0.0
    %192 = vmatpush1.msra.mxu0 %v157
    %193 = vmatprep.subr.mxu0 0.0
    %194 = vmatpush1.msra.mxu0 %v158
    %195 = vmatprep.subr.mxu0 0.0
    %196 = vmatpush1.msra.mxu0 %v159
    %197 = vmatprep.subr.mxu0 0.0
    %198 = vmatpush1.msra.mxu0 %v160
    %199 = vmatprep.subr.mxu0 0.0
    %200 = vmatpush1.msra.mxu0 %v161
    %201 = vmatprep.subr.mxu0 0.0
    %202 = vmatpush1.msra.mxu0 0.0
    %203 = vmatprep.subr.mxu0 0.0
    %204 = vmatpush1.msra.mxu0 0.0
    %205 = vmatprep.subr.mxu0 0.0
    %206 = vmatpush1.msra.mxu0 0.0
    %207 = vmatprep.subr.mxu0 0.0
    %208 = vmatpush1.msra.mxu0 0.0
    %209 = vmatprep.subr.mxu0 0.0
    %210 = vmatpush1.msra.mxu0 0.0
    %211 = vmatprep.subr.mxu0 0.0
    %212 = vmatpush1.msra.mxu0 0.0
    %213 = vmatprep.subr.mxu0 0.0
    %214 = vmatpush1.msra.mxu0 0.0
    %215 = vmatprep.subr.mxu0 0.0
    %216 = vmatpush1.msra.mxu0 0.0
    %217 = vmatprep.subr.mxu0 0.0
    %218 = vmatpush1.msra.mxu0 0.0
    %219 = vmatprep.subr.mxu0 0.0
    %220 = vmatpush1.msra.mxu0 0.0
    %221 = vmatprep.subr.mxu0 0.0
    %222 = vmatpush1.msra.mxu0 0.0
    %223 = vmatprep.subr.mxu0 0.0
    %224 = vmatpush1.msra.mxu0 0.0
    %225 = vmatprep.subr.mxu0 0.0
    %226 = vmatpush1.msra.mxu0 0.0
    %227 = vmatprep.subr.mxu0 0.0
    %228 = vmatpush1.msra.mxu0 0.0
    %229 = vmatprep.subr.mxu0 0.0
    %230 = vmatpush1.msra.mxu0 0.0
    %231 = vmatprep.subr.mxu0 0.0
    %232 = vmatpush1.msra.mxu0 0.0
    %233 = vmatprep.mubr.f32.mxu0 0.0
    %234 = vmatmul.mubr.f32.gmra.mrb[0].mxu0 %v143
    %v235 = vpop.f32.mrb[0].mxu0
    %v236 = vadd.f32 %v167, %v235
    %v237 = vpop.f32.mrb[0].mxu0
    %238 = vdwg.mxu0
    %239 = vst [vmem:[#allocation8] sm:$0xff] %v236
    // Predicated region
    $region34: #{tpu_custom_call.1} parent=1 // pred_check
      _
    $region35: #{tpu_custom_call.1} parent=1 // pred_check_branch
      %241 = sbr.rel (0) target = $region37
    $region36: #{tpu_custom_call.1} parent=1 // pred_region
      %s243 = ssub.s32 128, 128
      %244 = vsyncadd [#allocation4], %s243
      %s246 = sshll.u32 [#allocation8], 4
      %s247 = int_to_ptr.vmem [resolvable:$true] %s246
      %249 = dma.vmem_to_hbm [thread:$0]  %s247, 128, %s5, [#allocation4]
    $region37: #{tpu_custom_call.1} parent=1 // pred_fallthru
      _
    // Predicated region
    $region38: #{tpu_custom_call.1} parent=1 // pred_check
      _
    $region39: #{tpu_custom_call.1} parent=1 // pred_check_branch
      %251 = sbr.rel (0) target = $region41
    $region40: #{tpu_custom_call.1} parent=1 // pred_region
      %252 = dma.done [#allocation4], 128
    $region41: #{tpu_custom_call.1} parent=1 // pred_fallthru
      _
    %253 = vsyncpa [#allocation3], 1
    %254 = vsyncpa [#allocation6], 1
    %255 = vsyncpa [#allocation4], 1

</llo_original>
